<compile_context>
chip_gen: v7x
topology: tpu7x:2x2x1
jax: 0.10.0
libtpu: 0.0.40
codegen_flags: <defaults>
</compile_context>

<pallas_src>
import jax
import jax.numpy as jnp
from jax.experimental import pallas as pl
from jax.experimental.pallas import tpu as pltpu

IN_DIM = 784
H1_DIM = 128
H2_DIM = 64
OUT_DIM = 10
OUT_PAD = 128          # lane-dense output width
NEG_BIG = -1e30        # bias for the padded logit columns


def _round_up(x, m):
    return ((x + m - 1) // m) * m


def mlp_kernel(x_ref, w1_ref, b1_ref, w2_ref, b2_ref, w3_ref, b3_ref, o_ref):
    # x tile: (TB, 784) f32 in VMEM; cast to bf16 only as an MXU operand.
    x = x_ref[...].astype(jnp.bfloat16)

    # fc1 + bias + ReLU   (dropout == identity in eval mode)
    h1 = jnp.dot(x, w1_ref[...], preferred_element_type=jnp.float32) + b1_ref[...]
    h1 = jnp.maximum(h1, 0.0)                                     # (TB, 128) f32

    # fc2 + bias + ReLU
    h2 = jnp.dot(h1.astype(jnp.bfloat16), w2_ref[...],
                 preferred_element_type=jnp.float32) + b2_ref[...]
    h2 = jnp.maximum(h2, 0.0)                                     # (TB, 64) f32

    # output linear (padded to 128 lanes; padded columns carry a -1e30 bias)
    logits = jnp.dot(h2.astype(jnp.bfloat16), w3_ref[...],
                     preferred_element_type=jnp.float32) + b3_ref[...]  # (TB, 128)

    # log_softmax over dim=1 (numerically stable; padded cols exp to 0)
    m = jnp.max(logits, axis=-1, keepdims=True)
    shifted = logits - m
    lse = jnp.log(jnp.sum(jnp.exp(shifted), axis=-1, keepdims=True))
    o_ref[...] = shifted - lse


def mnist_classifier_forward(x_nchw, params, *, block_b=1024):
    """x_nchw: (B, 1, 28, 28) float32.  Returns (B, 10) log-probabilities."""
    B = x_nchw.shape[0]
    x = x_nchw.reshape(B, -1).astype(jnp.float32)                 # (B, 784)

    w1, b1, w2, b2, w3, b3 = params

    # Weights -> bf16 once (tiny, stays VMEM-resident); biases stay f32.
    w1b = w1.astype(jnp.bfloat16)
    w2b = w2.astype(jnp.bfloat16)
    w3b = jnp.pad(w3.astype(jnp.bfloat16), ((0, 0), (0, OUT_PAD - OUT_DIM)))
    b3p = jnp.pad(b1[:, :0], ((0, 0), (0, 0)))  # placeholder, replaced below
    b3p = jnp.pad(b3, ((0, 0), (0, OUT_PAD - OUT_DIM)), constant_values=NEG_BIG)

    # Batch tiling: TB multiple of 16 (bf16 sublane packing), pad B to TB*steps.
    TB = min(block_b, _round_up(B, 16))
    Bp = _round_up(B, TB)
    if Bp != B:
        x = jnp.pad(x, ((0, Bp - B), (0, 0)))
    steps = Bp // TB

    full = lambda i: (0, 0)  # weights/biases: same block every step -> DMA'd once

    out = pl.pallas_call(
        mlp_kernel,
        out_shape=jax.ShapeDtypeStruct((Bp, OUT_PAD), jnp.float32),
        grid=(steps,),
        in_specs=[
            pl.BlockSpec((TB, IN_DIM), lambda i: (i, 0)),          # x tile
            pl.BlockSpec((IN_DIM, H1_DIM), full),                  # w1
            pl.BlockSpec((1, H1_DIM), full),                       # b1
            pl.BlockSpec((H1_DIM, H2_DIM), full),                  # w2
            pl.BlockSpec((1, H2_DIM), full),                       # b2
            pl.BlockSpec((H2_DIM, OUT_PAD), full),                 # w3 (padded)
            pl.BlockSpec((1, OUT_PAD), full),                      # b3 (padded)
        ],
        out_specs=pl.BlockSpec((TB, OUT_PAD), lambda i: (i, 0)),
        compiler_params=pltpu.CompilerParams(
            dimension_semantics=("parallel",)),
    )(x, w1b, b1, w2b, b2, w3b, b3p)

    return out[:B, :OUT_DIM]


def init_params(key):
    """Deterministic init matching nn.Linear shapes (stored transposed)."""
    k1, k2, k3, k4, k5, k6 = jax.random.split(key, 6)

    def linear(kw, kb, fan_in, fan_out):
        bound = 1.0 / (fan_in ** 0.5)
        w = jax.random.uniform(kw, (fan_in, fan_out), jnp.float32, -bound, bound)
        b = jax.random.uniform(kb, (1, fan_out), jnp.float32, -bound, bound)
        return w, b

    w1, b1 = linear(k1, k2, IN_DIM, H1_DIM)
    w2, b2 = linear(k3, k4, H1_DIM, H2_DIM)
    w3, b3 = linear(k5, k6, H2_DIM, OUT_DIM)
    return (w1, b1, w2, b2, w3, b3)


if __name__ == "__main__":
    key = jax.random.PRNGKey(0)
    k_params, k_x = jax.random.split(key)

    params = init_params(k_params)
    x = jax.random.normal(k_x, (8, 1, 28, 28), jnp.float32)   # small MNIST-like batch

    out = mnist_classifier_forward(x, params)
    out = jax.block_until_ready(out)

    # pure-JAX f32 reference
    w1, b1, w2, b2, w3, b3 = params
    xf = x.reshape(8, -1)
    h1 = jnp.maximum(xf @ w1 + b1, 0.0)
    h2 = jnp.maximum(h1 @ w2 + b2, 0.0)
    ref = jax.nn.log_softmax(h2 @ w3 + b3, axis=-1)

    assert out.shape == (8, 10)
    assert jnp.allclose(jnp.exp(out).sum(axis=-1), 1.0, atol=1e-4)   # valid log-probs
    assert float(jnp.max(jnp.abs(out - ref))) < 5e-2                 # bf16-matmul tolerance

    print("KERNEL_OK")
</pallas_src>

<mosaic_0001>
module attributes {stable_mosaic.version = 11 : i64} {
  func.func @mlp_kernel(%arg0: i32, %arg1: memref<16x784xf32, #tpu.memory_space<vmem>>, %arg2: memref<784x128xbf16, #tpu.memory_space<vmem>>, %arg3: memref<1x128xf32, #tpu.memory_space<vmem>>, %arg4: memref<128x64xbf16, #tpu.memory_space<vmem>>, %arg5: memref<1x64xf32, #tpu.memory_space<vmem>>, %arg6: memref<64x128xbf16, #tpu.memory_space<vmem>>, %arg7: memref<1x128xf32, #tpu.memory_space<vmem>>, %arg8: memref<16x128xf32, #tpu.memory_space<vmem>>) attributes {dimension_semantics = [#tpu.dimension_semantics<parallel>], iteration_bounds = array<i64: 1>, scalar_prefetch = 0 : i64, scratch_operands = 0 : i64, tpu.core_type = #tpu.core_type<tc>, window_params = [{transform_indices = @transform_0, window_bounds = array<i64: 16, 784>}, {pipeline_mode = #tpu.pipeline_mode<synchronous>, transform_indices = @transform_1, window_bounds = array<i64: 784, 128>}, {pipeline_mode = #tpu.pipeline_mode<synchronous>, transform_indices = @transform_2, window_bounds = array<i64: 1, 128>}, {pipeline_mode = #tpu.pipeline_mode<synchronous>, transform_indices = @transform_3, window_bounds = array<i64: 128, 64>}, {pipeline_mode = #tpu.pipeline_mode<synchronous>, transform_indices = @transform_4, window_bounds = array<i64: 1, 64>}, {pipeline_mode = #tpu.pipeline_mode<synchronous>, transform_indices = @transform_5, window_bounds = array<i64: 64, 128>}, {pipeline_mode = #tpu.pipeline_mode<synchronous>, transform_indices = @transform_6, window_bounds = array<i64: 1, 128>}, {transform_indices = @transform_7, window_bounds = array<i64: 16, 128>}]} {
    %c0 = arith.constant 0 : index
    %c0_0 = arith.constant 0 : index
    %0 = vector.load %arg1[%c0, %c0_0] : memref<16x784xf32, #tpu.memory_space<vmem>>, vector<16x784xf32>
    %1 = arith.truncf %0 : vector<16x784xf32> to vector<16x784xbf16>
    %c0_1 = arith.constant 0 : index
    %c0_2 = arith.constant 0 : index
    %2 = vector.load %arg2[%c0_1, %c0_2] : memref<784x128xbf16, #tpu.memory_space<vmem>>, vector<784x128xbf16>
    %cst = arith.constant dense<0.000000e+00> : vector<16x128xf32>
    %3 = tpu.matmul %1, %2, %cst {dimension_numbers = #tpu.dot_dimension_numbers<[1], [0], [0], [1], [0, 0, 1, 1], [], []>} : vector<16x784xbf16>, vector<784x128xbf16>, vector<16x128xf32> -> vector<16x128xf32>
    %c0_3 = arith.constant 0 : index
    %c0_4 = arith.constant 0 : index
    %4 = vector.load %arg3[%c0_3, %c0_4] : memref<1x128xf32, #tpu.memory_space<vmem>>, vector<1x128xf32>
    %5 = vector.broadcast %4 : vector<1x128xf32> to vector<16x128xf32>
    %6 = arith.addf %3, %5 : vector<16x128xf32>
    %cst_5 = arith.constant 0.000000e+00 : f32
    %7 = vector.broadcast %cst_5 : f32 to vector<16x128xf32>
    %8 = arith.maximumf %6, %7 : vector<16x128xf32>
    %9 = arith.truncf %8 : vector<16x128xf32> to vector<16x128xbf16>
    %c0_6 = arith.constant 0 : index
    %c0_7 = arith.constant 0 : index
    %10 = vector.load %arg4[%c0_6, %c0_7] : memref<128x64xbf16, #tpu.memory_space<vmem>>, vector<128x64xbf16>
    %cst_8 = arith.constant dense<0.000000e+00> : vector<16x64xf32>
    %11 = tpu.matmul %9, %10, %cst_8 {dimension_numbers = #tpu.dot_dimension_numbers<[1], [0], [0], [1], [0, 0, 1, 1], [], []>} : vector<16x128xbf16>, vector<128x64xbf16>, vector<16x64xf32> -> vector<16x64xf32>
    %c0_9 = arith.constant 0 : index
    %c0_10 = arith.constant 0 : index
    %12 = vector.load %arg5[%c0_9, %c0_10] : memref<1x64xf32, #tpu.memory_space<vmem>>, vector<1x64xf32>
    %13 = vector.broadcast %12 : vector<1x64xf32> to vector<16x64xf32>
    %14 = arith.addf %11, %13 : vector<16x64xf32>
    %cst_11 = arith.constant 0.000000e+00 : f32
    %15 = vector.broadcast %cst_11 : f32 to vector<16x64xf32>
    %16 = arith.maximumf %14, %15 : vector<16x64xf32>
    %17 = arith.truncf %16 : vector<16x64xf32> to vector<16x64xbf16>
    %c0_12 = arith.constant 0 : index
    %c0_13 = arith.constant 0 : index
    %18 = vector.load %arg6[%c0_12, %c0_13] : memref<64x128xbf16, #tpu.memory_space<vmem>>, vector<64x128xbf16>
    %cst_14 = arith.constant dense<0.000000e+00> : vector<16x128xf32>
    %19 = tpu.matmul %17, %18, %cst_14 {dimension_numbers = #tpu.dot_dimension_numbers<[1], [0], [0], [1], [0, 0, 1, 1], [], []>} : vector<16x64xbf16>, vector<64x128xbf16>, vector<16x128xf32> -> vector<16x128xf32>
    %c0_15 = arith.constant 0 : index
    %c0_16 = arith.constant 0 : index
    %20 = vector.load %arg7[%c0_15, %c0_16] : memref<1x128xf32, #tpu.memory_space<vmem>>, vector<1x128xf32>
    %21 = vector.broadcast %20 : vector<1x128xf32> to vector<16x128xf32>
    %22 = arith.addf %19, %21 : vector<16x128xf32>
    %cst_17 = arith.constant dense<0xFF800000> : vector<16xf32>
    %23 = vector.multi_reduction <maximumf>, %22, %cst_17 [1] : vector<16x128xf32> to vector<16xf32>
    %24 = vector.shape_cast %23 : vector<16xf32> to vector<16x1xf32>
    %25 = vector.broadcast %24 : vector<16x1xf32> to vector<16x128xf32>
    %26 = arith.subf %22, %25 : vector<16x128xf32>
    %27 = math.exp %26 : vector<16x128xf32>
    %cst_18 = arith.constant dense<0.000000e+00> : vector<16xf32>
    %28 = vector.multi_reduction <add>, %27, %cst_18 [1] : vector<16x128xf32> to vector<16xf32>
    %29 = vector.shape_cast %28 : vector<16xf32> to vector<16x1xf32>
    %30 = math.log %29 : vector<16x1xf32>
    %31 = vector.broadcast %30 : vector<16x1xf32> to vector<16x128xf32>
    %32 = arith.subf %26, %31 : vector<16x128xf32>
    %c0_19 = arith.constant 0 : index
    %c0_20 = arith.constant 0 : index
    %33 = vector.load %arg8[%c0_19, %c0_20] : memref<16x128xf32, #tpu.memory_space<vmem>>, vector<16x128xf32>
    tpu.vector_store %arg8[%c0_19, %c0_20], %32 {strides = array<i32>} : memref<16x128xf32, #tpu.memory_space<vmem>>, vector<16x128xf32>,
    return
  }
  func.func @transform_0(%arg0: i32) -> (i32, i32) {
    %c0_i32 = arith.constant 0 : i32
    %c0_i32_0 = arith.constant 0 : i32
    return %arg0, %c0_i32 : i32, i32
  }
  func.func @transform_1(%arg0: i32) -> (i32, i32) {
    %c0_i32 = arith.constant 0 : i32
    %c0_i32_0 = arith.constant 0 : i32
    %c0_i32_1 = arith.constant 0 : i32
    return %c0_i32, %c0_i32_0 : i32, i32
  }
  func.func @transform_2(%arg0: i32) -> (i32, i32) {
    %c0_i32 = arith.constant 0 : i32
    %c0_i32_0 = arith.constant 0 : i32
    %c0_i32_1 = arith.constant 0 : i32
    return %c0_i32, %c0_i32_0 : i32, i32
  }
  func.func @transform_3(%arg0: i32) -> (i32, i32) {
    %c0_i32 = arith.constant 0 : i32
    %c0_i32_0 = arith.constant 0 : i32
    %c0_i32_1 = arith.constant 0 : i32
    return %c0_i32, %c0_i32_0 : i32, i32
  }
  func.func @transform_4(%arg0: i32) -> (i32, i32) {
    %c0_i32 = arith.constant 0 : i32
    %c0_i32_0 = arith.constant 0 : i32
    %c0_i32_1 = arith.constant 0 : i32
    return %c0_i32, %c0_i32_0 : i32, i32
  }
  func.func @transform_5(%arg0: i32) -> (i32, i32) {
    %c0_i32 = arith.constant 0 : i32
    %c0_i32_0 = arith.constant 0 : i32
    %c0_i32_1 = arith.constant 0 : i32
    return %c0_i32, %c0_i32_0 : i32, i32
  }
  func.func @transform_6(%arg0: i32) -> (i32, i32) {
    %c0_i32 = arith.constant 0 : i32
    %c0_i32_0 = arith.constant 0 : i32
    %c0_i32_1 = arith.constant 0 : i32
    return %c0_i32, %c0_i32_0 : i32, i32
  }
  func.func @transform_7(%arg0: i32) -> (i32, i32) {
    %c0_i32 = arith.constant 0 : i32
    %c0_i32_0 = arith.constant 0 : i32
    return %arg0, %c0_i32 : i32, i32
  }
}

</mosaic_0001>

<llo_original>
// kernel: tpu_custom_call.1
$region0: #{tpu_custom_call.1}
  #allocation0 [shape = 'u32[]', space=smem, size = 0x4, offset = 0x4, fixed_abs, tag = 'smem constant byte address 0x4 - core index']
  #allocation1 [shape = 'u32[144,128]{1,0:T(1,128)}', space=vmem, size = 0x12000, scoped, tag = 'internal scratch']
  %s0 = inlined_call_operand.hbm [shape: f32[16,784], index: 0, kind: input, shape index: {}]
  %s1 = inlined_call_operand.hbm [shape: bf16[784,128], index: 1, kind: input, shape index: {}]
  %s2 = inlined_call_operand.vmem [shape: f32[1,128], index: 2, kind: input, shape index: {}]
  %s3 = inlined_call_operand.vmem [shape: bf16[128,64], index: 3, kind: input, shape index: {}]
  %s4 = inlined_call_operand.vmem [shape: f32[1,64], index: 4, kind: input, shape index: {}]
  %s5 = inlined_call_operand.vmem [shape: bf16[64,128], index: 5, kind: input, shape index: {}]
  %s6 = inlined_call_operand.vmem [shape: f32[1,128], index: 6, kind: input, shape index: {}]
  %s7 = inlined_call_operand.hbm [shape: f32[16,128], index: 7, kind: output, shape index: {}]
  %s8 = sld [smem:[#allocation0]]
  $region46: #{tpu_custom_call.1} parent=0
    _
  %s10 = ssub.s32 1, %s8
  %s11 = scalar_select 0, %s10, %s8
  $region1: #{tpu_custom_call.1} parent=0
    #allocation2 [shape = 'u8[57344]{0}', space=vmem, size = 0xe000, scoped, tag = 'input window, operand 0, single buffered']
    #allocation3 [shape = 's32[1]{0}', space=sflag, size = 0x4, scoped, tag = 'scoped memory for tpu_custom_call.1']
    #allocation4 [shape = 's32[1]{0}', space=sflag, size = 0x4, scoped, tag = 'scoped memory for tpu_custom_call.1']
    #allocation5 [shape = 'u8[200704]{0}', space=vmem, size = 0x31000, scoped, tag = 'input window, operand 1, single buffered']
    #allocation6 [shape = 's32[1]{0}', space=sflag, size = 0x4, scoped, tag = 'scoped memory for tpu_custom_call.1']
    #allocation7 [shape = 'u8[8192]{0}', space=vmem, size = 0x2000, scoped, tag = 'output window, operand 0, single buffered']
    %12 = vsyncpa [#allocation3], 0
    %13 = vsyncpa [#allocation6], 0
    %14 = vsyncpa [#allocation4], 0
    // Predicated region
    $region2: #{tpu_custom_call.1} parent=1 // pred_check
      _
    $region3: #{tpu_custom_call.1} parent=1 // pred_check_branch
      %16 = sbr.rel (0) target = $region5
    $region4: #{tpu_custom_call.1} parent=1 // pred_region
      %s18 = ssub.s32 1792, 1792
      %19 = vsyncadd [#allocation3], %s18
      %s20 = sshll.u32 [#allocation2], 4
      %s21 = int_to_ptr.vmem [resolvable:$true] %s20
      %26 = dma.hbm_to_vmem [thread:$0]  %s0, 1792, %s21, [#allocation3], 896, 896, 56
    $region5: #{tpu_custom_call.1} parent=1 // pred_fallthru
      _
    // Predicated region
    $region6: #{tpu_custom_call.1} parent=1 // pred_check
      _
    $region7: #{tpu_custom_call.1} parent=1 // pred_check_branch
      %28 = sbr.rel (0) target = $region9
    $region8: #{tpu_custom_call.1} parent=1 // pred_region
      %s30 = ssub.s32 6272, 6272
      %31 = vsyncadd [#allocation6], %s30
      %s32 = sshll.u32 [#allocation5], 4
      %s33 = int_to_ptr.vmem [resolvable:$true] %s32
      %38 = dma.hbm_to_vmem [thread:$0]  %s1, 6272, %s33, [#allocation6], 64, 64, 4
    $region9: #{tpu_custom_call.1} parent=1 // pred_fallthru
      _
    // Predicated region
    $region10: #{tpu_custom_call.1} parent=1 // pred_check
      _
    $region11: #{tpu_custom_call.1} parent=1 // pred_check_branch
      %40 = sbr.rel (0) target = $region13
    $region12: #{tpu_custom_call.1} parent=1 // pred_region
      _
    $region13: #{tpu_custom_call.1} parent=1 // pred_fallthru
      _
    // Predicated region
    $region14: #{tpu_custom_call.1} parent=1 // pred_check
      _
    $region15: #{tpu_custom_call.1} parent=1 // pred_check_branch
      %42 = sbr.rel (0) target = $region17
    $region16: #{tpu_custom_call.1} parent=1 // pred_region
      _
    $region17: #{tpu_custom_call.1} parent=1 // pred_fallthru
      _
    // Predicated region
    $region18: #{tpu_custom_call.1} parent=1 // pred_check
      _
    $region19: #{tpu_custom_call.1} parent=1 // pred_check_branch
      %44 = sbr.rel (0) target = $region21
    $region20: #{tpu_custom_call.1} parent=1 // pred_region
      _
    $region21: #{tpu_custom_call.1} parent=1 // pred_fallthru
      _
    // Predicated region
    $region22: #{tpu_custom_call.1} parent=1 // pred_check
      _
    $region23: #{tpu_custom_call.1} parent=1 // pred_check_branch
      %46 = sbr.rel (0) target = $region25
    $region24: #{tpu_custom_call.1} parent=1 // pred_region
      _
    $region25: #{tpu_custom_call.1} parent=1 // pred_fallthru
      _
    // Predicated region
    $region26: #{tpu_custom_call.1} parent=1 // pred_check
      _
    $region27: #{tpu_custom_call.1} parent=1 // pred_check_branch
      %48 = sbr.rel (0) target = $region29
    $region28: #{tpu_custom_call.1} parent=1 // pred_region
      _
    $region29: #{tpu_custom_call.1} parent=1 // pred_fallthru
      _
    // Predicated region
    $region30: #{tpu_custom_call.1} parent=1 // pred_check
      _
    $region31: #{tpu_custom_call.1} parent=1 // pred_check_branch
      %50 = sbr.rel (0) target = $region33
    $region32: #{tpu_custom_call.1} parent=1 // pred_region
      %51 = dma.done [#allocation3], 1792
    $region33: #{tpu_custom_call.1} parent=1 // pred_fallthru
      _
    // Predicated region
    $region34: #{tpu_custom_call.1} parent=1 // pred_check
      _
    $region35: #{tpu_custom_call.1} parent=1 // pred_check_branch
      %53 = sbr.rel (0) target = $region37
    $region36: #{tpu_custom_call.1} parent=1 // pred_region
      %54 = dma.done [#allocation6], 6272
    $region37: #{tpu_custom_call.1} parent=1 // pred_fallthru
      _
    %v56 = vld [vmem:[#allocation2] sm:$0xff]
    %v57 = vld [vmem:[#allocation2 + $0x8] sm:$0xff]
    %v58 = vld [vmem:[#allocation2 + $0x10] sm:$0xff]
    %v59 = vld [vmem:[#allocation2 + $0x18] sm:$0xff]
    %v60 = vld [vmem:[#allocation2 + $0x20] sm:$0xff]
    %v61 = vld [vmem:[#allocation2 + $0x28] sm:$0xff]
    %v62 = vld [vmem:[#allocation2 + $0x30] sm:$0xff]
    %v63 = vld [vmem:[#allocation2 + $0x38] sm:$0xff]
    %v64 = vld [vmem:[#allocation2 + $0x40] sm:$0xff]
    %v65 = vld [vmem:[#allocation2 + $0x48] sm:$0xff]
    %v66 = vld [vmem:[#allocation2 + $0x50] sm:$0xff]
    %v67 = vld [vmem:[#allocation2 + $0x58] sm:$0xff]
    %v68 = vld [vmem:[#allocation2 + $0x60] sm:$0xff]
    %v69 = vld [vmem:[#allocation2 + $0x68] sm:$0xff]
    %v70 = vpack.c.bf16 %v63, %v56
    %v71 = vpack.c.bf16 %v64, %v57
    %v72 = vpack.c.bf16 %v65, %v58
    %v73 = vpack.c.bf16 %v66, %v59
    %v74 = vpack.c.bf16 %v67, %v60
    %v75 = vpack.c.bf16 %v68, %v61
    %v76 = vpack.c.bf16 %v69, %v62
    %v77 = vld [vmem:[#allocation5] sm:$0xf]
    %v78 = vld [vmem:[#allocation5 + $0x4] sm:$0xf]
    %v79 = vld [vmem:[#allocation5 + $0x8] sm:$0xf]
    %v80 = vld [vmem:[#allocation5 + $0xc] sm:$0xf]
    %v81 = vld [vmem:[#allocation5 + $0x10] sm:$0xf]
    %v82 = vld [vmem:[#allocation5 + $0x14] sm:$0xf]
    %v83 = vld [vmem:[#allocation5 + $0x18] sm:$0xf]
    %v84 = vld [vmem:[#allocation5 + $0x1c] sm:$0xf]
    %v85 = vld [vmem:[#allocation5 + $0x20] sm:$0xf]
    %v86 = vld [vmem:[#allocation5 + $0x24] sm:$0xf]
    %v87 = vld [vmem:[#allocation5 + $0x28] sm:$0xf]
    %v88 = vld [vmem:[#allocation5 + $0x2c] sm:$0xf]
    %v89 = vld [vmem:[#allocation5 + $0x30] sm:$0xf]
    %v90 = vld [vmem:[#allocation5 + $0x34] sm:$0xf]
    %v91 = vld [vmem:[#allocation5 + $0x38] sm:$0xf]
    %v92 = vld [vmem:[#allocation5 + $0x3c] sm:$0xf]
    %v93 = vld [vmem:[#allocation5 + $0x40] sm:$0xf]
    %v94 = vld [vmem:[#allocation5 + $0x44] sm:$0xf]
    %v95 = vld [vmem:[#allocation5 + $0x48] sm:$0xf]
    %v96 = vld [vmem:[#allocation5 + $0x4c] sm:$0xf]
    %v97 = vld [vmem:[#allocation5 + $0x50] sm:$0xf]
    %v98 = vld [vmem:[#allocation5 + $0x54] sm:$0xf]
    %v99 = vld [vmem:[#allocation5 + $0x58] sm:$0xf]
    %v100 = vld [vmem:[#allocation5 + $0x5c] sm:$0xf]
    %v101 = vld [vmem:[#allocation5 + $0x60] sm:$0xf]
    %v102 = vld [vmem:[#allocation5 + $0x64] sm:$0xf]
    %v103 = vld [vmem:[#allocation5 + $0x68] sm:$0xf]
    %v104 = vld [vmem:[#allocation5 + $0x6c] sm:$0xf]
    %v105 = vld [vmem:[#allocation5 + $0x70] sm:$0xf]
    %v106 = vld [vmem:[#allocation5 + $0x74] sm:$0xf]
    %v107 = vld [vmem:[#allocation5 + $0x78] sm:$0xf]
    %v108 = vld [vmem:[#allocation5 + $0x7c] sm:$0xf]
    %v109 = vld [vmem:[#allocation5 + $0x80] sm:$0xf]
    %v110 = vld [vmem:[#allocation5 + $0x84] sm:$0xf]
    %v111 = vld [vmem:[#allocation5 + $0x88] sm:$0xf]
    %v112 = vld [vmem:[#allocation5 + $0x8c] sm:$0xf]
    %v113 = vld [vmem:[#allocation5 + $0x90] sm:$0xf]
    %v114 = vld [vmem:[#allocation5 + $0x94] sm:$0xf]
    %v115 = vld [vmem:[#allocation5 + $0x98] sm:$0xf]
    %v116 = vld [vmem:[#allocation5 + $0x9c] sm:$0xf]
    %v117 = vld [vmem:[#allocation5 + $0xa0] sm:$0xf]
    %v118 = vld [vmem:[#allocation5 + $0xa4] sm:$0xf]
    %v119 = vld [vmem:[#allocation5 + $0xa8] sm:$0xf]
    %v120 = vld [vmem:[#allocation5 + $0xac] sm:$0xf]
    %v121 = vld [vmem:[#allocation5 + $0xb0] sm:$0xf]
    %v122 = vld [vmem:[#allocation5 + $0xb4] sm:$0xf]
    %v123 = vld [vmem:[#allocation5 + $0xb8] sm:$0xf]
    %v124 = vld [vmem:[#allocation5 + $0xbc] sm:$0xf]
    %v125 = vld [vmem:[#allocation5 + $0xc0] sm:$0xf]
    %v126 = vld [vmem:[#allocation5 + $0xc4] sm:$0xf]
    %v127 = vld [vmem:[#allocation5 + $0xc8] sm:$0xf]
    %v128 = vld [vmem:[#allocation5 + $0xcc] sm:$0xf]
    %v129 = vld [vmem:[#allocation5 + $0xd0] sm:$0xf]
    %v130 = vld [vmem:[#allocation5 + $0xd4] sm:$0xf]
    %v131 = vld [vmem:[#allocation5 + $0xd8] sm:$0xf]
    %v132 = vld [vmem:[#allocation5 + $0xdc] sm:$0xf]
    %v133 = vld [vmem:[#allocation5 + $0xe0] sm:$0xf]
    %v134 = vld [vmem:[#allocation5 + $0xe4] sm:$0xf]
    %v135 = vld [vmem:[#allocation5 + $0xe8] sm:$0xf]
    %v136 = vld [vmem:[#allocation5 + $0xec] sm:$0xf]
    %v137 = vld [vmem:[#allocation5 + $0xf0] sm:$0xf]
    %v138 = vld [vmem:[#allocation5 + $0xf4] sm:$0xf]
    %v139 = vld [vmem:[#allocation5 + $0xf8] sm:$0xf]
    %v140 = vld [vmem:[#allocation5 + $0xfc] sm:$0xf]
    %v141 = vld [vmem:[#allocation5 + $0x100] sm:$0xf]
    %v142 = vld [vmem:[#allocation5 + $0x104] sm:$0xf]
    %v143 = vld [vmem:[#allocation5 + $0x108] sm:$0xf]
    %v144 = vld [vmem:[#allocation5 + $0x10c] sm:$0xf]
    %v145 = vld [vmem:[#allocation5 + $0x110] sm:$0xf]
    %v146 = vld [vmem:[#allocation5 + $0x114] sm:$0xf]
    %v147 = vld [vmem:[#allocation5 + $0x118] sm:$0xf]
    %v148 = vld [vmem:[#allocation5 + $0x11c] sm:$0xf]
    %v149 = vld [vmem:[#allocation5 + $0x120] sm:$0xf]
    %v150 = vld [vmem:[#allocation5 + $0x124] sm:$0xf]
    %v151 = vld [vmem:[#allocation5 + $0x128] sm:$0xf]
    %v152 = vld [vmem:[#allocation5 + $0x12c] sm:$0xf]
    %v153 = vld [vmem:[#allocation5 + $0x130] sm:$0xf]
    %v154 = vld [vmem:[#allocation5 + $0x134] sm:$0xf]
    %v155 = vld [vmem:[#allocation5 + $0x138] sm:$0xf]
    %v156 = vld [vmem:[#allocation5 + $0x13c] sm:$0xf]
    %v157 = vld [vmem:[#allocation5 + $0x140] sm:$0xf]
    %v158 = vld [vmem:[#allocation5 + $0x144] sm:$0xf]
    %v159 = vld [vmem:[#allocation5 + $0x148] sm:$0xf]
    %v160 = vld [vmem:[#allocation5 + $0x14c] sm:$0xf]
    %v161 = vld [vmem:[#allocation5 + $0x150] sm:$0xf]
    %v162 = vld [vmem:[#allocation5 + $0x154] sm:$0xf]
    %v163 = vld [vmem:[#allocation5 + $0x158] sm:$0xf]
    %v164 = vld [vmem:[#allocation5 + $0x15c] sm:$0xf]
    %v165 = vld [vmem:[#allocation5 + $0x160] sm:$0xf]
    %v166 = vld [vmem:[#allocation5 + $0x164] sm:$0xf]
    %v167 = vld [vmem:[#allocation5 + $0x168] sm:$0xf]
    %v168 = vld [vmem:[#allocation5 + $0x16c] sm:$0xf]
    %v169 = vld [vmem:[#allocation5 + $0x170] sm:$0xf]
    %v170 = vld [vmem:[#allocation5 + $0x174] sm:$0xf]
    %v171 = vld [vmem:[#allocation5 + $0x178] sm:$0xf]
    %v172 = vld [vmem:[#allocation5 + $0x17c] sm:$0xf]
    %v173 = vld [vmem:[#allocation5 + $0x180] sm:$0xf]
    %v174 = vld [vmem:[#allocation5 + $0x184] sm:$0xf]
    %v175 = vld [vmem:[%s2] sm:$0x1]
    %v177 = vlaneseq
    %v178 = vshrl.u32 %v177, 7
    %v179 = vsub.s32 0, %v178
    %v180 = vrot.slane %v175, %v179
    %v280 = vunpack.c.l.b16 %v77
    %v281 = vunpack.c.l.b16 %v78
    %v282 = vunpack.c.l.b16 %v79
    %v283 = vunpack.c.l.b16 %v80
    %v284 = vunpack.c.l.b16 %v81
    %v285 = vunpack.c.l.b16 %v82
    %v286 = vunpack.c.l.b16 %v83
    %v287 = vunpack.c.l.b16 %v84
    %v288 = vunpack.c.l.b16 %v85
    %v289 = vunpack.c.l.b16 %v86
    %v290 = vunpack.c.l.b16 %v87
    %v291 = vunpack.c.l.b16 %v88
    %v292 = vunpack.c.l.b16 %v89
    %v293 = vunpack.c.l.b16 %v90
    %v294 = vunpack.c.l.b16 %v91
    %v295 = vunpack.c.l.b16 %v92
    %v296 = vunpack.c.l.b16 %v93
    %v297 = vunpack.c.l.b16 %v94
    %v298 = vunpack.c.l.b16 %v95
    %v299 = vunpack.c.l.b16 %v96
    %v300 = vunpack.c.l.b16 %v97
    %v301 = vunpack.c.l.b16 %v98
    %v302 = vunpack.c.l.b16 %v99
    %v303 = vunpack.c.l.b16 %v100
    %v304 = vunpack.c.l.b16 %v101
    %v305 = vunpack.c.l.b16 %v102
    %v306 = vunpack.c.l.b16 %v103
    %v307 = vunpack.c.l.b16 %v104
    %v308 = vunpack.c.l.b16 %v105
    %v309 = vunpack.c.l.b16 %v106
    %v310 = vunpack.c.l.b16 %v107
    %v311 = vunpack.c.l.b16 %v108
    %v312 = vunpack.c.l.b16 %v109
    %v313 = vunpack.c.l.b16 %v110
    %v314 = vunpack.c.l.b16 %v111
    %v315 = vunpack.c.l.b16 %v112
    %v316 = vunpack.c.l.b16 %v113
    %v317 = vunpack.c.l.b16 %v114
    %v318 = vunpack.c.l.b16 %v115
    %v319 = vunpack.c.l.b16 %v116
    %v320 = vunpack.c.l.b16 %v117
    %v321 = vunpack.c.l.b16 %v118
    %v322 = vunpack.c.l.b16 %v119
    %v323 = vunpack.c.l.b16 %v120
    %v324 = vunpack.c.l.b16 %v121
    %v325 = vunpack.c.l.b16 %v122
    %v326 = vunpack.c.l.b16 %v123
    %v327 = vunpack.c.l.b16 %v124
    %v328 = vunpack.c.l.b16 %v125
    %v329 = vunpack.c.l.b16 %v126
    %v330 = vunpack.c.l.b16 %v127
    %v331 = vunpack.c.l.b16 %v128
    %v332 = vunpack.c.l.b16 %v129
    %v333 = vunpack.c.l.b16 %v130
    %v334 = vunpack.c.l.b16 %v131
    %v335 = vunpack.c.l.b16 %v132
    %v336 = vunpack.c.l.b16 %v133
    %v337 = vunpack.c.l.b16 %v134
    %v338 = vunpack.c.l.b16 %v135
    %v339 = vunpack.c.l.b16 %v136
    %v340 = vunpack.c.l.b16 %v137
    %v341 = vunpack.c.l.b16 %v138
    %v342 = vunpack.c.l.b16 %v139
    %v343 = vunpack.c.l.b16 %v140
    %v344 = vunpack.c.l.b16 %v141
    %v345 = vunpack.c.l.b16 %v142
    %v346 = vunpack.c.l.b16 %v143
    %v347 = vunpack.c.l.b16 %v144
    %v348 = vunpack.c.l.b16 %v145
    %v349 = vunpack.c.l.b16 %v146
    %v350 = vunpack.c.l.b16 %v147
    %v351 = vunpack.c.l.b16 %v148
    %v352 = vunpack.c.l.b16 %v149
    %v353 = vunpack.c.l.b16 %v150
    %v354 = vunpack.c.l.b16 %v151
    %v355 = vunpack.c.l.b16 %v152
    %v356 = vunpack.c.l.b16 %v153
    %v357 = vunpack.c.l.b16 %v154
    %v358 = vunpack.c.l.b16 %v155
    %v359 = vunpack.c.l.b16 %v156
    %v360 = vunpack.c.l.b16 %v157
    %v361 = vunpack.c.l.b16 %v158
    %v362 = vunpack.c.l.b16 %v159
    %v363 = vunpack.c.l.b16 %v160
    %v364 = vunpack.c.l.b16 %v161
    %v365 = vunpack.c.l.b16 %v162
    %v366 = vunpack.c.l.b16 %v163
    %v367 = vunpack.c.l.b16 %v164
    %v368 = vunpack.c.l.b16 %v165
    %v369 = vunpack.c.l.b16 %v166
    %v370 = vunpack.c.l.b16 %v167
    %v371 = vunpack.c.l.b16 %v168
    %v372 = vunpack.c.l.b16 %v169
    %v373 = vunpack.c.l.b16 %v170
    %v374 = vunpack.c.l.b16 %v171
    %v375 = vunpack.c.l.b16 %v172
    %v376 = vunpack.c.l.b16 %v173
    %v377 = vunpack.c.l.b16 %v174
    %v378 = vpack.c.b16 %v281, %v280
    %v379 = vpack.c.b16 %v283, %v282
    %v380 = vpack.c.b16 %v285, %v284
    %v381 = vpack.c.b16 %v287, %v286
    %v382 = vpack.c.b16 %v289, %v288
    %v383 = vpack.c.b16 %v291, %v290
    %v384 = vpack.c.b16 %v293, %v292
    %v385 = vpack.c.b16 %v295, %v294
    %v386 = vpack.c.b16 %v297, %v296
    %v387 = vpack.c.b16 %v299, %v298
    %v388 = vpack.c.b16 %v301, %v300
    %v389 = vpack.c.b16 %v303, %v302
    %v390 = vpack.c.b16 %v305, %v304
    %v391 = vpack.c.b16 %v307, %v306
    %v392 = vpack.c.b16 %v309, %v308
    %v393 = vpack.c.b16 %v311, %v310
    %v394 = vpack.c.b16 %v313, %v312
    %v395 = vpack.c.b16 %v315, %v314
    %v396 = vpack.c.b16 %v317, %v316
    %v397 = vpack.c.b16 %v319, %v318
    %v398 = vpack.c.b16 %v321, %v320
    %v399 = vpack.c.b16 %v323, %v322
    %v400 = vpack.c.b16 %v325, %v324
    %v401 = vpack.c.b16 %v327, %v326
    %v402 = vpack.c.b16 %v329, %v328
    %v403 = vpack.c.b16 %v331, %v330
    %v404 = vpack.c.b16 %v333, %v332
    %v405 = vpack.c.b16 %v335, %v334
    %v406 = vpack.c.b16 %v337, %v336
    %v407 = vpack.c.b16 %v339, %v338
    %v408 = vpack.c.b16 %v341, %v340
    %v409 = vpack.c.b16 %v343, %v342
    %v410 = vpack.c.b16 %v345, %v344
    %v411 = vpack.c.b16 %v347, %v346
    %v412 = vpack.c.b16 %v349, %v348
    %v413 = vpack.c.b16 %v351, %v350
    %v414 = vpack.c.b16 %v353, %v352
    %v415 = vpack.c.b16 %v355, %v354
    %v416 = vpack.c.b16 %v357, %v356
    %v417 = vpack.c.b16 %v359, %v358
    %v418 = vpack.c.b16 %v361, %v360
    %v419 = vpack.c.b16 %v363, %v362
    %v420 = vpack.c.b16 %v365, %v364
    %v421 = vpack.c.b16 %v367, %v366
    %v422 = vpack.c.b16 %v369, %v368
    %v423 = vpack.c.b16 %v371, %v370
    %v424 = vpack.c.b16 %v373, %v372
    %v425 = vpack.c.b16 %v375, %v374
    %v426 = vpack.c.b16 %v377, %v376
    %vm476 = vcmask 130048
    %v478 = vsel %vm476, %v76, 0
    %480 = vmatprep.subr.bf16.mxu0 0
    %481 = vmatpush1.bf16.msra.mxu0 %v378
    %482 = vmatprep.subr.bf16.mxu0 0
    %483 = vmatpush1.bf16.msra.mxu0 %v379
    %484 = vmatprep.subr.bf16.mxu0 0
    %485 = vmatpush1.bf16.msra.mxu0 %v380
    %486 = vmatprep.subr.bf16.mxu0 0
    %487 = vmatpush1.bf16.msra.mxu0 %v381
    %488 = vmatprep.subr.bf16.mxu0 0
    %489 = vmatpush1.bf16.msra.mxu0 %v382
    %490 = vmatprep.subr.bf16.mxu0 0
    %491 = vmatpush1.bf16.msra.mxu0 %v383
    %492 = vmatprep.subr.bf16.mxu0 0
    %493 = vmatpush1.bf16.msra.mxu0 %v384
    %494 = vmatprep.subr.bf16.mxu0 0
    %495 = vmatpush1.bf16.msra.mxu0 %v385
    %496 = vmatprep.subr.bf16.mxu0 0
    %497 = vmatpush1.bf16.msra.mxu0 %v386
    %498 = vmatprep.subr.bf16.mxu0 0
    %499 = vmatpush1.bf16.msra.mxu0 %v387
    %500 = vmatprep.subr.bf16.mxu0 0
    %501 = vmatpush1.bf16.msra.mxu0 %v388
    %502 = vmatprep.subr.bf16.mxu0 0
    %503 = vmatpush1.bf16.msra.mxu0 %v389
    %504 = vmatprep.subr.bf16.mxu0 0
    %505 = vmatpush1.bf16.msra.mxu0 %v390
    %506 = vmatprep.subr.bf16.mxu0 0
    %507 = vmatpush1.bf16.msra.mxu0 %v391
    %508 = vmatprep.subr.bf16.mxu0 0
    %509 = vmatpush1.bf16.msra.mxu0 %v392
    %510 = vmatprep.subr.bf16.mxu0 0
    %511 = vmatpush1.bf16.msra.mxu0 %v393
    %512 = vmatprep.mubr.bf16.mxu0 %v71
    %513 = vmatmul.mubr.bf16.gmra.mrb[0].mxu0 %v70
    %v514 = vpop.f32.mrb[0].mxu0
    %v515 = vadd.f32 %v180, %v514
    %v516 = vpop.f32.mrb[0].mxu0
    %v517 = vpop.f32.mrb[0].mxu0
    %v518 = vadd.f32 %v180, %v517
    %v519 = vpop.f32.mrb[0].mxu0
    %520 = vdwg.mxu0
    %521 = vmatprep.subr.bf16.mxu0 0
    %522 = vmatpush1.bf16.msra.mxu0 %v394
    %523 = vmatprep.subr.bf16.mxu0 0
    %524 = vmatpush1.bf16.msra.mxu0 %v395
    %525 = vmatprep.subr.bf16.mxu0 0
    %526 = vmatpush1.bf16.msra.mxu0 %v396
    %527 = vmatprep.subr.bf16.mxu0 0
    %528 = vmatpush1.bf16.msra.mxu0 %v397
    %529 = vmatprep.subr.bf16.mxu0 0
    %530 = vmatpush1.bf16.msra.mxu0 %v398
    %531 = vmatprep.subr.bf16.mxu0 0
    %532 = vmatpush1.bf16.msra.mxu0 %v399
    %533 = vmatprep.subr.bf16.mxu0 0
    %534 = vmatpush1.bf16.msra.mxu0 %v400
    %535 = vmatprep.subr.bf16.mxu0 0
    %536 = vmatpush1.bf16.msra.mxu0 %v401
    %537 = vmatprep.subr.bf16.mxu0 0
    %538 = vmatpush1.bf16.msra.mxu0 %v402
    %539 = vmatprep.subr.bf16.mxu0 0
    %540 = vmatpush1.bf16.msra.mxu0 %v403
    %541 = vmatprep.subr.bf16.mxu0 0
    %542 = vmatpush1.bf16.msra.mxu0 %v404
    %543 = vmatprep.subr.bf16.mxu0 0
    %544 = vmatpush1.bf16.msra.mxu0 %v405
    %545 = vmatprep.subr.bf16.mxu0 0
    %546 = vmatpush1.bf16.msra.mxu0 %v406
    %547 = vmatprep.subr.bf16.mxu0 0
    %548 = vmatpush1.bf16.msra.mxu0 %v407
    %549 = vmatprep.subr.bf16.mxu0 0
    %550 = vmatpush1.bf16.msra.mxu0 %v408
    %551 = vmatprep.subr.bf16.mxu0 0
    %552 = vmatpush1.bf16.msra.mxu0 %v409
    %553 = vmatprep.mubr.bf16.mxu0 %v73
    %554 = vmatmul.mubr.bf16.gmra.mrb[0].mxu0 %v72
    %v555 = vpop.f32.mrb[0].mxu0
    %v556 = vadd.f32 %v515, %v555
    %v557 = vpop.f32.mrb[0].mxu0
    %v558 = vpop.f32.mrb[0].mxu0
    %v559 = vadd.f32 %v518, %v558
    %v560 = vpop.f32.mrb[0].mxu0
    %561 = vdwg.mxu0
    %562 = vmatprep.subr.bf16.mxu0 0
    %563 = vmatpush1.bf16.msra.mxu0 %v410
    %564 = vmatprep.subr.bf16.mxu0 0
    %565 = vmatpush1.bf16.msra.mxu0 %v411
    %566 = vmatprep.subr.bf16.mxu0 0
    %567 = vmatpush1.bf16.msra.mxu0 %v412
    %568 = vmatprep.subr.bf16.mxu0 0
    %569 = vmatpush1.bf16.msra.mxu0 %v413
    %570 = vmatprep.subr.bf16.mxu0 0
    %571 = vmatpush1.bf16.msra.mxu0 %v414
    %572 = vmatprep.subr.bf16.mxu0 0
    %573 = vmatpush1.bf16.msra.mxu0 %v415
    %574 = vmatprep.subr.bf16.mxu0 0
    %575 = vmatpush1.bf16.msra.mxu0 %v416
    %576 = vmatprep.subr.bf16.mxu0 0
    %577 = vmatpush1.bf16.msra.mxu0 %v417
    %578 = vmatprep.subr.bf16.mxu0 0
    %579 = vmatpush1.bf16.msra.mxu0 %v418
    %580 = vmatprep.subr.bf16.mxu0 0
    %581 = vmatpush1.bf16.msra.mxu0 %v419
    %582 = vmatprep.subr.bf16.mxu0 0
    %583 = vmatpush1.bf16.msra.mxu0 %v420
    %584 = vmatprep.subr.bf16.mxu0 0
    %585 = vmatpush1.bf16.msra.mxu0 %v421
    %586 = vmatprep.subr.bf16.mxu0 0
    %587 = vmatpush1.bf16.msra.mxu0 %v422
    %588 = vmatprep.subr.bf16.mxu0 0
    %589 = vmatpush1.bf16.msra.mxu0 %v423
    %590 = vmatprep.subr.bf16.mxu0 0
    %591 = vmatpush1.bf16.msra.mxu0 %v424
    %592 = vmatprep.subr.bf16.mxu0 0
    %593 = vmatpush1.bf16.msra.mxu0 %v425
    %594 = vmatprep.mubr.bf16.mxu0 %v75
    %595 = vmatmul.mubr.bf16.gmra.mrb[0].mxu0 %v74
    %v596 = vpop.f32.mrb[0].mxu0
    %v597 = vadd.f32 %v556, %v596
    %v598 = vpop.f32.mrb[0].mxu0
    %v599 = vpop.f32.mrb[0].mxu0
    %v600 = vadd.f32 %v559, %v599
    %v601 = vpop.f32.mrb[0].mxu0
    %602 = vdwg.mxu0
    %603 = vmatprep.subr.bf16.mxu0 0
    %604 = vmatpush1.bf16.msra.mxu0 %v426
    %605 = vmatprep.subr.bf16.mxu0 0
    %606 = vmatpush1.bf16.msra.mxu0 0
    %607 = vmatprep.subr.bf16.mxu0 0
    %608 = vmatpush1.bf16.msra.mxu0 0
    %609 = vmatprep.subr.bf16.mxu0 0
    %610 = vmatpush1.bf16.msra.mxu0 0
    %611 = vmatprep.subr.bf16.mxu0 0
    %612 = vmatpush1.bf16.msra.mxu0 0
    %613 = vmatprep.subr.bf16.mxu0 0
    %614 = vmatpush1.bf16.msra.mxu0 0
    %615 = vmatprep.subr.bf16.mxu0 0
    %616 = vmatpush1.bf16.msra.mxu0 0
    %617 = vmatprep.subr.bf16.mxu0 0
    %618 = vmatpush1.bf16.msra.mxu0 0
    %619 = vmatprep.subr.bf16.mxu0 0
    %620 = vmatpush1.bf16.msra.mxu0 0
    %621 = vmatprep.subr.bf16.mxu0 0
    %622 = vmatpush1.bf16.msra.mxu0 0
    %623 = vmatprep.subr.bf16.mxu0 0
    %624 = vmatpush1.bf16.msra.mxu0 0
    %625 = vmatprep.subr.bf16.mxu0 0
    %626 = vmatpush1.bf16.msra.mxu0 0
    %627 = vmatprep.subr.bf16.mxu0 0
    %628 = vmatpush1.bf16.msra.mxu0 0
    %629 = vmatprep.subr.bf16.mxu0 0
    %630 = vmatpush1.bf16.msra.mxu0 0
    %631 = vmatprep.subr.bf16.mxu0 0
    %632 = vmatpush1.bf16.msra.mxu0 0
    %633 = vmatprep.subr.bf16.mxu0 0
    %634 = vmatpush1.bf16.msra.mxu0 0
    %635 = vmatprep.mubr.bf16.mxu0 0
    %636 = vmatmul.mubr.bf16.gmra.mrb[0].mxu0 %v478
    %v637 = vpop.f32.mrb[0].mxu0
    %v638 = vadd.f32 %v597, %v637
    %v639 = vpop.f32.mrb[0].mxu0
    %v640 = vpop.f32.mrb[0].mxu0
    %v641 = vadd.f32 %v600, %v640
    %v642 = vpop.f32.mrb[0].mxu0
    %643 = vdwg.mxu0
    %v644 = vmax.f32 %v638, 0.0
    %v645 = vmax.f32 %v641, 0.0
    %v646 = vpack.c.bf16 %v645, %v644
    %v647 = vld [vmem:[%s3] sm:$0xf]
    %v648 = vld [vmem:[%s3 + $0x4] sm:$0xf]
    %v649 = vld [vmem:[%s3 + $0x8] sm:$0xf]
    %v650 = vld [vmem:[%s3 + $0xc] sm:$0xf]
    %v651 = vld [vmem:[%s3 + $0x10] sm:$0xf]
    %v652 = vld [vmem:[%s3 + $0x14] sm:$0xf]
    %v653 = vld [vmem:[%s3 + $0x18] sm:$0xf]
    %v654 = vld [vmem:[%s3 + $0x1c] sm:$0xf]
    %v655 = vld [vmem:[%s3 + $0x20] sm:$0xf]
    %v656 = vld [vmem:[%s3 + $0x24] sm:$0xf]
    %v657 = vld [vmem:[%s3 + $0x28] sm:$0xf]
    %v658 = vld [vmem:[%s3 + $0x2c] sm:$0xf]
    %v659 = vld [vmem:[%s3 + $0x30] sm:$0xf]
    %v660 = vld [vmem:[%s3 + $0x34] sm:$0xf]
    %v661 = vld [vmem:[%s3 + $0x38] sm:$0xf]
    %v662 = vld [vmem:[%s3 + $0x3c] sm:$0xf]
    %v663 = vld [vmem:[%s4] sm:$0x1]
    %v665 = vlaneseq
    %v666 = vshrl.u32 %v665, 7
    %v667 = vsub.s32 0, %v666
    %v668 = vrot.slane %v663, %v667
    %v686 = vunpack.c.l.b16 %v647
    %v687 = vunpack.c.l.b16 %v648
    %v688 = vunpack.c.l.b16 %v649
    %v689 = vunpack.c.l.b16 %v650
    %v690 = vunpack.c.l.b16 %v651
    %v691 = vunpack.c.l.b16 %v652
    %v692 = vunpack.c.l.b16 %v653
    %v693 = vunpack.c.l.b16 %v654
    %v694 = vunpack.c.l.b16 %v655
    %v695 = vunpack.c.l.b16 %v656
    %v696 = vunpack.c.l.b16 %v657
    %v697 = vunpack.c.l.b16 %v658
    %v698 = vunpack.c.l.b16 %v659
    %v699 = vunpack.c.l.b16 %v660
    %v700 = vunpack.c.l.b16 %v661
    %v701 = vunpack.c.l.b16 %v662
    %v702 = vpack.c.b16 %v687, %v686
    %v703 = vpack.c.b16 %v689, %v688
    %v704 = vpack.c.b16 %v691, %v690
    %v705 = vpack.c.b16 %v693, %v692
    %v706 = vpack.c.b16 %v695, %v694
    %v707 = vpack.c.b16 %v697, %v696
    %v708 = vpack.c.b16 %v699, %v698
    %v709 = vpack.c.b16 %v701, %v700
    %718 = vmatprep.subr.bf16.mxu0 0
    %719 = vmatpush1.bf16.msra.mxu0 %v702
    %720 = vmatprep.subr.bf16.mxu0 0
    %721 = vmatpush1.bf16.msra.mxu0 %v703
    %722 = vmatprep.subr.bf16.mxu0 0
    %723 = vmatpush1.bf16.msra.mxu0 %v704
    %724 = vmatprep.subr.bf16.mxu0 0
    %725 = vmatpush1.bf16.msra.mxu0 %v705
    %726 = vmatprep.subr.bf16.mxu0 0
    %727 = vmatpush1.bf16.msra.mxu0 %v706
    %728 = vmatprep.subr.bf16.mxu0 0
    %729 = vmatpush1.bf16.msra.mxu0 %v707
    %730 = vmatprep.subr.bf16.mxu0 0
    %731 = vmatpush1.bf16.msra.mxu0 %v708
    %732 = vmatprep.subr.bf16.mxu0 0
    %733 = vmatpush1.bf16.msra.mxu0 %v709
    %734 = vmatprep.subr.bf16.mxu0 0
    %735 = vmatpush1.bf16.msra.mxu0 0
    %736 = vmatprep.subr.bf16.mxu0 0
    %737 = vmatpush1.bf16.msra.mxu0 0
    %738 = vmatprep.subr.bf16.mxu0 0
    %739 = vmatpush1.bf16.msra.mxu0 0
    %740 = vmatprep.subr.bf16.mxu0 0
    %741 = vmatpush1.bf16.msra.mxu0 0
    %742 = vmatprep.subr.bf16.mxu0 0
    %743 = vmatpush1.bf16.msra.mxu0 0
    %744 = vmatprep.subr.bf16.mxu0 0
    %745 = vmatpush1.bf16.msra.mxu0 0
    %746 = vmatprep.subr.bf16.mxu0 0
    %747 = vmatpush1.bf16.msra.mxu0 0
    %748 = vmatprep.subr.bf16.mxu0 0
    %749 = vmatpush1.bf16.msra.mxu0 0
    %750 = vmatprep.mubr.bf16.mxu0 0
    %751 = vmatmul.mubr.bf16.gmra.mrb[0].mxu0 %v646
    %v752 = vpop.f32.mrb[0].mxu0
    %v753 = vadd.f32 %v668, %v752
    %v754 = vpop.f32.mrb[0].mxu0
    %v755 = vpop.f32.mrb[0].mxu0
    %v756 = vadd.f32 %v668, %v755
    %v757 = vpop.f32.mrb[0].mxu0
    %758 = vdwg.mxu0
    %v759 = vmax.f32 %v753, 0.0
    %v760 = vmax.f32 %v756, 0.0
    %v761 = vpack.c.bf16 %v760, %v759
    %v762 = vld [vmem:[%s5] sm:$0xf]
    %v763 = vld [vmem:[%s5 + $0x4] sm:$0xf]
    %v764 = vld [vmem:[%s5 + $0x8] sm:$0xf]
    %v765 = vld [vmem:[%s5 + $0xc] sm:$0xf]
    %v766 = vld [vmem:[%s5 + $0x10] sm:$0xf]
    %v767 = vld [vmem:[%s5 + $0x14] sm:$0xf]
    %v768 = vld [vmem:[%s5 + $0x18] sm:$0xf]
    %v769 = vld [vmem:[%s5 + $0x1c] sm:$0xf]
    %v770 = vld [vmem:[%s6] sm:$0x1]
    %v772 = vlaneseq
    %v773 = vshrl.u32 %v772, 7
    %v774 = vsub.s32 0, %v773
    %v775 = vrot.slane %v770, %v774
    %v785 = vunpack.c.l.b16 %v762
    %v786 = vunpack.c.l.b16 %v763
    %v787 = vunpack.c.l.b16 %v764
    %v788 = vunpack.c.l.b16 %v765
    %v789 = vunpack.c.l.b16 %v766
    %v790 = vunpack.c.l.b16 %v767
    %v791 = vunpack.c.l.b16 %v768
    %v792 = vunpack.c.l.b16 %v769
    %v793 = vpack.c.b16 %v786, %v785
    %v794 = vpack.c.b16 %v788, %v787
    %v795 = vpack.c.b16 %v790, %v789
    %v796 = vpack.c.b16 %v792, %v791
    %vm801 = vcmask 523264
    %v803 = vsel %vm801, %v761, 0
    %805 = vmatprep.subr.bf16.mxu0 0
    %806 = vmatpush1.bf16.msra.mxu0 %v793
    %807 = vmatprep.subr.bf16.mxu0 0
    %808 = vmatpush1.bf16.msra.mxu0 %v794
    %809 = vmatprep.subr.bf16.mxu0 0
    %810 = vmatpush1.bf16.msra.mxu0 %v795
    %811 = vmatprep.subr.bf16.mxu0 0
    %812 = vmatpush1.bf16.msra.mxu0 %v796
    %813 = vmatprep.subr.bf16.mxu0 0
    %814 = vmatpush1.bf16.msra.mxu0 0
    %815 = vmatprep.subr.bf16.mxu0 0
    %816 = vmatpush1.bf16.msra.mxu0 0
    %817 = vmatprep.subr.bf16.mxu0 0
    %818 = vmatpush1.bf16.msra.mxu0 0
    %819 = vmatprep.subr.bf16.mxu0 0
    %820 = vmatpush1.bf16.msra.mxu0 0
    %821 = vmatprep.subr.bf16.mxu0 0
    %822 = vmatpush1.bf16.msra.mxu0 0
    %823 = vmatprep.subr.bf16.mxu0 0
    %824 = vmatpush1.bf16.msra.mxu0 0
    %825 = vmatprep.subr.bf16.mxu0 0
    %826 = vmatpush1.bf16.msra.mxu0 0
    %827 = vmatprep.subr.bf16.mxu0 0
    %828 = vmatpush1.bf16.msra.mxu0 0
    %829 = vmatprep.subr.bf16.mxu0 0
    %830 = vmatpush1.bf16.msra.mxu0 0
    %831 = vmatprep.subr.bf16.mxu0 0
    %832 = vmatpush1.bf16.msra.mxu0 0
    %833 = vmatprep.subr.bf16.mxu0 0
    %834 = vmatpush1.bf16.msra.mxu0 0
    %835 = vmatprep.subr.bf16.mxu0 0
    %836 = vmatpush1.bf16.msra.mxu0 0
    %837 = vmatprep.mubr.bf16.mxu0 0
    %838 = vmatmul.mubr.bf16.gmra.mrb[0].mxu0 %v803
    %v839 = vpop.f32.mrb[0].mxu0
    %v840 = vadd.f32 %v775, %v839
    %v841 = vpop.f32.mrb[0].mxu0
    %v842 = vpop.f32.mrb[0].mxu0
    %v843 = vadd.f32 %v775, %v842
    %v844 = vpop.f32.mrb[0].mxu0
    %845 = vdwg.mxu0
    %846 = vmax.xlane.f32.xlu0 %v840
    %v847 = vpop.xlane.xlu0 %846
    %848 = vmax.xlane.f32.xlu0 %v843
    %v849 = vpop.xlane.xlu0 %848
    %v850 = vsub.f32 %v840, %v847
    %v851 = vsub.f32 %v843, %v849
    %v852 = vmul.f32 %v850, 1.442695
    %v853 = vpow.pop %v852
    %v854 = vmul.f32 %v851, 1.442695
    %v855 = vpow.pop %v854
    %856 = vadd.xlane.f32.xlu0 %v853
    %v857 = vpop.xlane.xlu0 %856
    %858 = vadd.xlane.f32.xlu0 %v855
    %v859 = vpop.xlane.xlu0 %858
    %v860 = vlog2.pop %v857
    %v861 = vmul.f32 %v860, 0.6931472
    %v862 = vlog2.pop %v859
    %v863 = vmul.f32 %v862, 0.6931472
    %v864 = vsub.f32 %v850, %v861
    %v865 = vsub.f32 %v851, %v863
    %866 = vst [vmem:[#allocation7] sm:$0xff] %v864
    %867 = vst [vmem:[#allocation7 + $0x8] sm:$0xff] %v865
    // Predicated region
    $region38: #{tpu_custom_call.1} parent=1 // pred_check
      _
    $region39: #{tpu_custom_call.1} parent=1 // pred_check_branch
      %869 = sbr.rel (0) target = $region41
    $region40: #{tpu_custom_call.1} parent=1 // pred_region
      %s871 = ssub.s32 256, 256
      %872 = vsyncadd [#allocation4], %s871
      %s873 = sshll.u32 [#allocation7], 4
      %s874 = int_to_ptr.vmem [resolvable:$true] %s873
      %879 = dma.vmem_to_hbm [thread:$0]  %s874, 256, %s7, [#allocation4], 128, 128, 8
    $region41: #{tpu_custom_call.1} parent=1 // pred_fallthru
      _
    // Predicated region
    $region42: #{tpu_custom_call.1} parent=1 // pred_check
      _
    $region43: #{tpu_custom_call.1} parent=1 // pred_check_branch
      %881 = sbr.rel (0) target = $region45
    $region44: #{tpu_custom_call.1} parent=1 // pred_region
      %882 = dma.done [#allocation4], 256
    $region45: #{tpu_custom_call.1} parent=1 // pred_fallthru
      _
    %883 = vsyncpa [#allocation3], 1
    %884 = vsyncpa [#allocation6], 1
    %885 = vsyncpa [#allocation4], 1

</llo_original>
